<compile_context>
chip_gen: v5e
topology: v5e:2x2
jax: 0.10.0
libtpu: 0.0.40
codegen_flags: <defaults>
</compile_context>

<pallas_src>
import math

import jax
import jax.numpy as jnp
from jax.experimental import pallas as pl
from jax.experimental.pallas import tpu as pltpu

H1 = 256
H2 = 128
OUT = 1


def _round_up(n, m):
    return ((n + m - 1) // m) * m


def _cdiv(a, b):
    return -(-a // b)


def _disc_kernel(x_ref, w1_ref, b1_ref, w2_ref, b2_ref, w3_ref, b3_ref, o_ref):
    """Fused Linear->LeakyReLU->Linear->LeakyReLU->Linear->Sigmoid on one
    batch tile.  Matmuls run in bf16 on the MXU with f32 accumulation; the
    bias-add / LeakyReLU run in the dtype of the bias refs (bf16 on v6e/v7x,
    f32 on v5e).  The final sigmoid values are stored lane-dense as (1, TB)."""
    x = x_ref[...].astype(jnp.bfloat16)                  # VPU cast, hidden under DMA

    h1 = jnp.dot(x, w1_ref[...], preferred_element_type=jnp.float32)
    h1 = h1.astype(b1_ref.dtype) + b1_ref[...]
    h1 = jnp.maximum(h1, 0.2 * h1)                       # LeakyReLU(0.2)

    h2 = jnp.dot(h1.astype(jnp.bfloat16), w2_ref[...],
                 preferred_element_type=jnp.float32)
    h2 = h2.astype(b2_ref.dtype) + b2_ref[...]
    h2 = jnp.maximum(h2, 0.2 * h2)                       # LeakyReLU(0.2)

    z = jnp.dot(h2.astype(jnp.bfloat16), w3_ref[...],
                preferred_element_type=jnp.float32) + b3_ref[...]   # (TB, 1) f32
    # Sigmoid: exp + approx reciprocal both ride the EUP slot.
    sig = pl.reciprocal(1.0 + jnp.exp(-z), approx=True)
    # Lane-dense store: (TB, 1) column -> (1, TB) row (cheap XLU relayout).
    o_ref[...] = jnp.transpose(sig)


def init_params(input_dim, key):
    """Deterministic init mirroring PyTorch's default Linear init
    (uniform in +/- 1/sqrt(fan_in)). Stored in f32; cast at call time."""
    ks = jax.random.split(key, 6)

    def lin(kw, kb, fan_in, fan_out):
        bound = 1.0 / math.sqrt(fan_in)
        w = jax.random.uniform(kw, (fan_in, fan_out), jnp.float32, -bound, bound)
        b = jax.random.uniform(kb, (1, fan_out), jnp.float32, -bound, bound)
        return w, b

    w1, b1 = lin(ks[0], ks[1], input_dim, H1)
    w2, b2 = lin(ks[2], ks[3], H1, H2)
    w3, b3 = lin(ks[4], ks[5], H2, OUT)
    return w1, b1, w2, b2, w3, b3


def _chip_tuning():
    """Per-generation knobs: activation dtype (bf16 where the VPU has a bf16
    path, i.e. v6e/v7x) and physical VMEM capacity (for the vmem-limit cap)."""
    kind = ""
    try:
        kind = jax.devices()[0].device_kind.lower()
    except Exception:
        pass
    is_tpu = "tpu" in kind
    old_vpu = any(t in kind for t in ("v2", "v3", "v4", "v5"))   # no bf16 VPU path
    act_dtype = jnp.bfloat16 if (is_tpu and not old_vpu) else jnp.float32
    try:
        vmem_phys = int(pltpu.get_tpu_info().vmem_capacity_bytes)
    except Exception:
        vmem_phys = 64 << 20    # conservative: v7x per-TensorCore VMEM
    return act_dtype, vmem_phys


def discriminator_forward(x, params, batch_tile=2048):
    w1, b1, w2, b2, w3, b3 = params
    B, D = x.shape

    act_dtype, vmem_phys = _chip_tuning()
    act_bytes = jnp.dtype(act_dtype).itemsize
    x_bytes = jnp.dtype(x.dtype).itemsize

    # ---- batch tile --------------------------------------------------------
    # Keep the per-step working set around <=12 MiB (fits the default scoped
    # VMEM on every generation), round the tile to 16 rows (bf16 sublanes),
    # and aim for >=2 grid steps so v7x's two TensorCores both get work.
    row_bytes = 2 * D * x_bytes + (H1 + H2) * 4 + 2 * 4
    tb_cap = max(256, ((12 << 20) // row_bytes) // 16 * 16)
    tb_half_batch = _round_up(max(_cdiv(B, 2), 1), 16)
    TB = max(16, min(batch_tile, tb_cap, tb_half_batch))
    # Last block may be ragged: Pallas clips the input DMA; the throwaway rows
    # produce throwaway outputs that are sliced off below.
    nsteps = _cdiv(B, TB)

    # ---- operands ----------------------------------------------------------
    # x goes in untouched (no wrapper-side pad/cast pass over HBM); weights
    # are cast once to bf16, biases to the per-chip activation dtype.
    w1_b = w1.astype(jnp.bfloat16)
    w2_b = w2.astype(jnp.bfloat16)
    w3_b = w3.astype(jnp.bfloat16)
    b1_a = b1.astype(act_dtype)
    b2_a = b2.astype(act_dtype)
    b3_f = b3.astype(jnp.float32)

    weight_bytes = (D * H1 + H1 * H2 + H2 * OUT) * 2
    bias_bytes = (H1 + H2) * act_bytes + OUT * 4
    per_step_bytes = (2 * TB * D * x_bytes                # x tile, double-buffered
                      + 2 * (weight_bytes + bias_bytes)   # resident operands (<=2 bufs)
                      + 2 * TB * 4                        # output row, double-buffered
                      + 2 * TB * (H1 + H2) * 4)           # live intermediates (f32 bound)
    vmem_limit = int(min(min(48 << 20, (vmem_phys * 3) // 4),
                         max(32 << 20, 2 * per_step_bytes)))

    cost = pl.CostEstimate(
        flops=2 * B * (D * H1 + H1 * H2 + H2 * OUT),
        transcendentals=B * OUT,
        bytes_accessed=(B * D * x_bytes + weight_bytes + bias_bytes
                        + nsteps * TB * 4),
    )

    def run(single_buffer_weights):
        def resident(shape):
            # Grid-invariant operands stay VMEM-resident; one DMA buffer is
            # enough since the block never changes.
            if single_buffer_weights:
                return pl.BlockSpec(shape, lambda i: (0,) * len(shape),
                                    pipeline_mode=pl.Buffered(1))
            return pl.BlockSpec(shape, lambda i: (0,) * len(shape))

        return pl.pallas_call(
            _disc_kernel,
            out_shape=jax.ShapeDtypeStruct((nsteps, TB), jnp.float32),
            grid=(nsteps,),
            in_specs=[
                pl.BlockSpec((TB, D), lambda i: (i, 0)),   # x batch tile (orig dtype)
                resident((D, H1)),                         # W1 (bf16)
                resident((1, H1)),                         # b1
                resident((H1, H2)),                        # W2 (bf16)
                resident((1, H2)),                         # b2
                resident((H2, OUT)),                       # W3 (bf16)
                resident((1, OUT)),                        # b3 (f32)
            ],
            # Lane-dense output: one (1, TB) row of sigmoids per grid step.
            out_specs=pl.BlockSpec((1, TB), lambda i: (i, 0)),
            compiler_params=pltpu.CompilerParams(
                dimension_semantics=("parallel",),
                vmem_limit_bytes=vmem_limit,
            ),
            cost_estimate=cost,
        )(x, w1_b, b1_a, w2_b, b2_a, w3_b, b3_f)

    try:
        out_rows = run(single_buffer_weights=True)
    except Exception:
        # Fallback if this jax build rejects pipeline_mode=pl.Buffered(1):
        # default double-buffered resident operands (only costs a bit of VMEM).
        out_rows = run(single_buffer_weights=False)

    return out_rows.reshape(-1)[:B].reshape(B, OUT)


def reference_forward(x, params):
    w1, b1, w2, b2, w3, b3 = params
    h1 = x @ w1 + b1
    h1 = jnp.where(h1 > 0, h1, 0.2 * h1)
    h2 = h1 @ w2 + b2
    h2 = jnp.where(h2 > 0, h2, 0.2 * h2)
    z = h2 @ w3 + b3
    return jax.nn.sigmoid(z)


if __name__ == "__main__":
    key = jax.random.PRNGKey(0)
    k_in, k_par = jax.random.split(key)

    batch, input_dim = 2, 64
    x = jax.random.normal(k_in, (batch, input_dim), jnp.float32)
    params = init_params(input_dim, k_par)

    out = discriminator_forward(x, params)
    out = jax.block_until_ready(out)

    ref = reference_forward(x, params)
    assert out.shape == (batch, 1)
    # bf16 matmuls/activations + approx reciprocal -> loosened tolerance
    # vs the f32 reference.
    assert jnp.allclose(out, ref, atol=2e-2, rtol=2e-2)

    print("KERNEL_OK")
</pallas_src>

<mosaic_0001>
module attributes {stable_mosaic.version = 11 : i64} {
  func.func @_disc_kernel(%arg0: i32, %arg1: memref<16x64xf32, #tpu.memory_space<vmem>>, %arg2: memref<64x256xbf16, #tpu.memory_space<vmem>>, %arg3: memref<1x256xf32, #tpu.memory_space<vmem>>, %arg4: memref<256x128xbf16, #tpu.memory_space<vmem>>, %arg5: memref<1x128xf32, #tpu.memory_space<vmem>>, %arg6: memref<128x1xbf16, #tpu.memory_space<vmem>>, %arg7: memref<1x1xf32, #tpu.memory_space<vmem>>, %arg8: memref<1x16xf32, #tpu.memory_space<vmem>>) attributes {dimension_semantics = [#tpu.dimension_semantics<parallel>], iteration_bounds = array<i64: 1>, scalar_prefetch = 0 : i64, scratch_operands = 0 : i64, tpu.core_type = #tpu.core_type<tc>, window_params = [{transform_indices = @transform_0, window_bounds = array<i64: 16, 64>}, {pipeline_mode = #tpu.pipeline_mode<synchronous>, transform_indices = @transform_1, window_bounds = array<i64: 64, 256>}, {pipeline_mode = #tpu.pipeline_mode<synchronous>, transform_indices = @transform_2, window_bounds = array<i64: 1, 256>}, {pipeline_mode = #tpu.pipeline_mode<synchronous>, transform_indices = @transform_3, window_bounds = array<i64: 256, 128>}, {pipeline_mode = #tpu.pipeline_mode<synchronous>, transform_indices = @transform_4, window_bounds = array<i64: 1, 128>}, {pipeline_mode = #tpu.pipeline_mode<synchronous>, transform_indices = @transform_5, window_bounds = array<i64: 128, 1>}, {pipeline_mode = #tpu.pipeline_mode<synchronous>, transform_indices = @transform_6, window_bounds = array<i64: 1, 1>}, {transform_indices = @transform_7, window_bounds = array<i64: 1, 16>}]} {
    %c0 = arith.constant 0 : index
    %c0_0 = arith.constant 0 : index
    %0 = vector.load %arg1[%c0, %c0_0] : memref<16x64xf32, #tpu.memory_space<vmem>>, vector<16x64xf32>
    %1 = arith.truncf %0 : vector<16x64xf32> to vector<16x64xbf16>
    %c0_1 = arith.constant 0 : index
    %c0_2 = arith.constant 0 : index
    %2 = vector.load %arg2[%c0_1, %c0_2] : memref<64x256xbf16, #tpu.memory_space<vmem>>, vector<64x256xbf16>
    %cst = arith.constant dense<0.000000e+00> : vector<16x256xf32>
    %3 = tpu.matmul %1, %2, %cst {dimension_numbers = #tpu.dot_dimension_numbers<[1], [0], [0], [1], [0, 0, 1, 1], [], []>} : vector<16x64xbf16>, vector<64x256xbf16>, vector<16x256xf32> -> vector<16x256xf32>
    %c0_3 = arith.constant 0 : index
    %c0_4 = arith.constant 0 : index
    %4 = vector.load %arg3[%c0_3, %c0_4] : memref<1x256xf32, #tpu.memory_space<vmem>>, vector<1x256xf32>
    %5 = vector.broadcast %4 : vector<1x256xf32> to vector<16x256xf32>
    %6 = arith.addf %3, %5 : vector<16x256xf32>
    %cst_5 = arith.constant 2.000000e-01 : f32
    %7 = vector.broadcast %cst_5 : f32 to vector<16x256xf32>
    %8 = arith.mulf %7, %6 : vector<16x256xf32>
    %9 = arith.maximumf %6, %8 : vector<16x256xf32>
    %10 = arith.truncf %9 : vector<16x256xf32> to vector<16x256xbf16>
    %c0_6 = arith.constant 0 : index
    %c0_7 = arith.constant 0 : index
    %11 = vector.load %arg4[%c0_6, %c0_7] : memref<256x128xbf16, #tpu.memory_space<vmem>>, vector<256x128xbf16>
    %cst_8 = arith.constant dense<0.000000e+00> : vector<16x128xf32>
    %12 = tpu.matmul %10, %11, %cst_8 {dimension_numbers = #tpu.dot_dimension_numbers<[1], [0], [0], [1], [0, 0, 1, 1], [], []>} : vector<16x256xbf16>, vector<256x128xbf16>, vector<16x128xf32> -> vector<16x128xf32>
    %c0_9 = arith.constant 0 : index
    %c0_10 = arith.constant 0 : index
    %13 = vector.load %arg5[%c0_9, %c0_10] : memref<1x128xf32, #tpu.memory_space<vmem>>, vector<1x128xf32>
    %14 = vector.broadcast %13 : vector<1x128xf32> to vector<16x128xf32>
    %15 = arith.addf %12, %14 : vector<16x128xf32>
    %cst_11 = arith.constant 2.000000e-01 : f32
    %16 = vector.broadcast %cst_11 : f32 to vector<16x128xf32>
    %17 = arith.mulf %16, %15 : vector<16x128xf32>
    %18 = arith.maximumf %15, %17 : vector<16x128xf32>
    %19 = arith.truncf %18 : vector<16x128xf32> to vector<16x128xbf16>
    %c0_12 = arith.constant 0 : index
    %c0_13 = arith.constant 0 : index
    %20 = vector.load %arg6[%c0_12, %c0_13] : memref<128x1xbf16, #tpu.memory_space<vmem>>, vector<128x1xbf16>
    %cst_14 = arith.constant dense<0.000000e+00> : vector<16x1xf32>
    %21 = tpu.matmul %19, %20, %cst_14 {dimension_numbers = #tpu.dot_dimension_numbers<[1], [0], [0], [1], [0, 0, 1, 1], [], []>} : vector<16x128xbf16>, vector<128x1xbf16>, vector<16x1xf32> -> vector<16x1xf32>
    %c0_15 = arith.constant 0 : index
    %c0_16 = arith.constant 0 : index
    %22 = vector.load %arg7[%c0_15, %c0_16] : memref<1x1xf32, #tpu.memory_space<vmem>>, vector<1x1xf32>
    %23 = vector.broadcast %22 : vector<1x1xf32> to vector<16x1xf32>
    %24 = arith.addf %21, %23 : vector<16x1xf32>
    %cst_17 = arith.constant 0.000000e+00 : f32
    %25 = vector.broadcast %cst_17 : f32 to vector<16x1xf32>
    %26 = arith.subf %25, %24 : vector<16x1xf32>
    %27 = math.exp %26 : vector<16x1xf32>
    %cst_18 = arith.constant 1.000000e+00 : f32
    %28 = vector.broadcast %cst_18 : f32 to vector<16x1xf32>
    %29 = arith.addf %28, %27 : vector<16x1xf32>
    %30 = tpu.reciprocal %29 {approx = true} : vector<16x1xf32> -> vector<16x1xf32>
    %31 = tpu.transpose %30, [1, 0] : vector<16x1xf32> -> vector<1x16xf32>
    %c0_19 = arith.constant 0 : index
    %c0_20 = arith.constant 0 : index
    %32 = vector.load %arg8[%c0_19, %c0_20] : memref<1x16xf32, #tpu.memory_space<vmem>>, vector<1x16xf32>
    tpu.vector_store %arg8[%c0_19, %c0_20], %31 {strides = array<i32>} : memref<1x16xf32, #tpu.memory_space<vmem>>, vector<1x16xf32>,
    return
  }
  func.func @transform_0(%arg0: i32) -> (i32, i32) {
    %c0_i32 = arith.constant 0 : i32
    %c0_i32_0 = arith.constant 0 : i32
    return %arg0, %c0_i32 : i32, i32
  }
  func.func @transform_1(%arg0: i32) -> (i32, i32) {
    %c0_i32 = arith.constant 0 : i32
    %c0_i32_0 = arith.constant 0 : i32
    %c0_i32_1 = arith.constant 0 : i32
    return %c0_i32, %c0_i32_0 : i32, i32
  }
  func.func @transform_2(%arg0: i32) -> (i32, i32) {
    %c0_i32 = arith.constant 0 : i32
    %c0_i32_0 = arith.constant 0 : i32
    %c0_i32_1 = arith.constant 0 : i32
    return %c0_i32, %c0_i32_0 : i32, i32
  }
  func.func @transform_3(%arg0: i32) -> (i32, i32) {
    %c0_i32 = arith.constant 0 : i32
    %c0_i32_0 = arith.constant 0 : i32
    %c0_i32_1 = arith.constant 0 : i32
    return %c0_i32, %c0_i32_0 : i32, i32
  }
  func.func @transform_4(%arg0: i32) -> (i32, i32) {
    %c0_i32 = arith.constant 0 : i32
    %c0_i32_0 = arith.constant 0 : i32
    %c0_i32_1 = arith.constant 0 : i32
    return %c0_i32, %c0_i32_0 : i32, i32
  }
  func.func @transform_5(%arg0: i32) -> (i32, i32) {
    %c0_i32 = arith.constant 0 : i32
    %c0_i32_0 = arith.constant 0 : i32
    %c0_i32_1 = arith.constant 0 : i32
    return %c0_i32, %c0_i32_0 : i32, i32
  }
  func.func @transform_6(%arg0: i32) -> (i32, i32) {
    %c0_i32 = arith.constant 0 : i32
    %c0_i32_0 = arith.constant 0 : i32
    %c0_i32_1 = arith.constant 0 : i32
    return %c0_i32, %c0_i32_0 : i32, i32
  }
  func.func @transform_7(%arg0: i32) -> (i32, i32) {
    %c0_i32 = arith.constant 0 : i32
    %c0_i32_0 = arith.constant 0 : i32
    return %arg0, %c0_i32 : i32, i32
  }
}

module attributes {stable_mosaic.version = 11 : i64} {
  func.func @_disc_kernel(%arg0: i32, %arg1: memref<16x64xf32, #tpu.memory_space<vmem>>, %arg2: memref<64x256xbf16, #tpu.memory_space<vmem>>, %arg3: memref<1x256xf32, #tpu.memory_space<vmem>>, %arg4: memref<256x128xbf16, #tpu.memory_space<vmem>>, %arg5: memref<1x128xf32, #tpu.memory_space<vmem>>, %arg6: memref<128x1xbf16, #tpu.memory_space<vmem>>, %arg7: memref<1x1xf32, #tpu.memory_space<vmem>>, %arg8: memref<1x16xf32, #tpu.memory_space<vmem>>) attributes {dimension_semantics = [#tpu.dimension_semantics<parallel>], iteration_bounds = array<i64: 1>, scalar_prefetch = 0 : i64, scratch_operands = 0 : i64, tpu.core_type = #tpu.core_type<tc>, window_params = [{transform_indices = @transform_0, window_bounds = array<i64: 16, 64>}, {pipeline_mode = #tpu.pipeline_mode<synchronous>, transform_indices = @transform_1, window_bounds = array<i64: 64, 256>}, {pipeline_mode = #tpu.pipeline_mode<synchronous>, transform_indices = @transform_2, window_bounds = array<i64: 1, 256>}, {pipeline_mode = #tpu.pipeline_mode<synchronous>, transform_indices = @transform_3, window_bounds = array<i64: 256, 128>}, {pipeline_mode = #tpu.pipeline_mode<synchronous>, transform_indices = @transform_4, window_bounds = array<i64: 1, 128>}, {pipeline_mode = #tpu.pipeline_mode<synchronous>, transform_indices = @transform_5, window_bounds = array<i64: 128, 1>}, {pipeline_mode = #tpu.pipeline_mode<synchronous>, transform_indices = @transform_6, window_bounds = array<i64: 1, 1>}, {transform_indices = @transform_7, window_bounds = array<i64: 1, 16>}]} {
    %c0 = arith.constant 0 : index
    %c0_0 = arith.constant 0 : index
    %0 = vector.load %arg1[%c0, %c0_0] : memref<16x64xf32, #tpu.memory_space<vmem>>, vector<16x64xf32>
    %1 = arith.truncf %0 : vector<16x64xf32> to vector<16x64xbf16>
    %c0_1 = arith.constant 0 : index
    %c0_2 = arith.constant 0 : index
    %2 = vector.load %arg2[%c0_1, %c0_2] : memref<64x256xbf16, #tpu.memory_space<vmem>>, vector<64x256xbf16>
    %cst = arith.constant dense<0.000000e+00> : vector<16x256xf32>
    %3 = tpu.matmul %1, %2, %cst {dimension_numbers = #tpu.dot_dimension_numbers<[1], [0], [0], [1], [0, 0, 1, 1], [], []>} : vector<16x64xbf16>, vector<64x256xbf16>, vector<16x256xf32> -> vector<16x256xf32>
    %c0_3 = arith.constant 0 : index
    %c0_4 = arith.constant 0 : index
    %4 = vector.load %arg3[%c0_3, %c0_4] : memref<1x256xf32, #tpu.memory_space<vmem>>, vector<1x256xf32>
    %5 = vector.broadcast %4 : vector<1x256xf32> to vector<16x256xf32>
    %6 = arith.addf %3, %5 : vector<16x256xf32>
    %cst_5 = arith.constant 2.000000e-01 : f32
    %7 = vector.broadcast %cst_5 : f32 to vector<16x256xf32>
    %8 = arith.mulf %7, %6 : vector<16x256xf32>
    %9 = arith.maximumf %6, %8 : vector<16x256xf32>
    %10 = arith.truncf %9 : vector<16x256xf32> to vector<16x256xbf16>
    %c0_6 = arith.constant 0 : index
    %c0_7 = arith.constant 0 : index
    %11 = vector.load %arg4[%c0_6, %c0_7] : memref<256x128xbf16, #tpu.memory_space<vmem>>, vector<256x128xbf16>
    %cst_8 = arith.constant dense<0.000000e+00> : vector<16x128xf32>
    %12 = tpu.matmul %10, %11, %cst_8 {dimension_numbers = #tpu.dot_dimension_numbers<[1], [0], [0], [1], [0, 0, 1, 1], [], []>} : vector<16x256xbf16>, vector<256x128xbf16>, vector<16x128xf32> -> vector<16x128xf32>
    %c0_9 = arith.constant 0 : index
    %c0_10 = arith.constant 0 : index
    %13 = vector.load %arg5[%c0_9, %c0_10] : memref<1x128xf32, #tpu.memory_space<vmem>>, vector<1x128xf32>
    %14 = vector.broadcast %13 : vector<1x128xf32> to vector<16x128xf32>
    %15 = arith.addf %12, %14 : vector<16x128xf32>
    %cst_11 = arith.constant 2.000000e-01 : f32
    %16 = vector.broadcast %cst_11 : f32 to vector<16x128xf32>
    %17 = arith.mulf %16, %15 : vector<16x128xf32>
    %18 = arith.maximumf %15, %17 : vector<16x128xf32>
    %19 = arith.truncf %18 : vector<16x128xf32> to vector<16x128xbf16>
    %c0_12 = arith.constant 0 : index
    %c0_13 = arith.constant 0 : index
    %20 = vector.load %arg6[%c0_12, %c0_13] : memref<128x1xbf16, #tpu.memory_space<vmem>>, vector<128x1xbf16>
    %cst_14 = arith.constant dense<0.000000e+00> : vector<16x1xf32>
    %21 = tpu.matmul %19, %20, %cst_14 {dimension_numbers = #tpu.dot_dimension_numbers<[1], [0], [0], [1], [0, 0, 1, 1], [], []>} : vector<16x128xbf16>, vector<128x1xbf16>, vector<16x1xf32> -> vector<16x1xf32>
    %c0_15 = arith.constant 0 : index
    %c0_16 = arith.constant 0 : index
    %22 = vector.load %arg7[%c0_15, %c0_16] : memref<1x1xf32, #tpu.memory_space<vmem>>, vector<1x1xf32>
    %23 = vector.broadcast %22 : vector<1x1xf32> to vector<16x1xf32>
    %24 = arith.addf %21, %23 : vector<16x1xf32>
    %cst_17 = arith.constant 0.000000e+00 : f32
    %25 = vector.broadcast %cst_17 : f32 to vector<16x1xf32>
    %26 = arith.subf %25, %24 : vector<16x1xf32>
    %27 = math.exp %26 : vector<16x1xf32>
    %cst_18 = arith.constant 1.000000e+00 : f32
    %28 = vector.broadcast %cst_18 : f32 to vector<16x1xf32>
    %29 = arith.addf %28, %27 : vector<16x1xf32>
    %30 = tpu.reciprocal %29 {approx = true} : vector<16x1xf32> -> vector<16x1xf32>
    %31 = tpu.transpose %30, [1, 0] : vector<16x1xf32> -> vector<1x16xf32>
    %c0_19 = arith.constant 0 : index
    %c0_20 = arith.constant 0 : index
    %32 = vector.load %arg8[%c0_19, %c0_20] : memref<1x16xf32, #tpu.memory_space<vmem>>, vector<1x16xf32>
    tpu.vector_store %arg8[%c0_19, %c0_20], %31 {strides = array<i32>} : memref<1x16xf32, #tpu.memory_space<vmem>>, vector<1x16xf32>,
    return
  }
  func.func @transform_0(%arg0: i32) -> (i32, i32) {
    %c0_i32 = arith.constant 0 : i32
    %c0_i32_0 = arith.constant 0 : i32
    return %arg0, %c0_i32 : i32, i32
  }
  func.func @transform_1(%arg0: i32) -> (i32, i32) {
    %c0_i32 = arith.constant 0 : i32
    %c0_i32_0 = arith.constant 0 : i32
    %c0_i32_1 = arith.constant 0 : i32
    return %c0_i32, %c0_i32_0 : i32, i32
  }
  func.func @transform_2(%arg0: i32) -> (i32, i32) {
    %c0_i32 = arith.constant 0 : i32
    %c0_i32_0 = arith.constant 0 : i32
    %c0_i32_1 = arith.constant 0 : i32
    return %c0_i32, %c0_i32_0 : i32, i32
  }
  func.func @transform_3(%arg0: i32) -> (i32, i32) {
    %c0_i32 = arith.constant 0 : i32
    %c0_i32_0 = arith.constant 0 : i32
    %c0_i32_1 = arith.constant 0 : i32
    return %c0_i32, %c0_i32_0 : i32, i32
  }
  func.func @transform_4(%arg0: i32) -> (i32, i32) {
    %c0_i32 = arith.constant 0 : i32
    %c0_i32_0 = arith.constant 0 : i32
    %c0_i32_1 = arith.constant 0 : i32
    return %c0_i32, %c0_i32_0 : i32, i32
  }
  func.func @transform_5(%arg0: i32) -> (i32, i32) {
    %c0_i32 = arith.constant 0 : i32
    %c0_i32_0 = arith.constant 0 : i32
    %c0_i32_1 = arith.constant 0 : i32
    return %c0_i32, %c0_i32_0 : i32, i32
  }
  func.func @transform_6(%arg0: i32) -> (i32, i32) {
    %c0_i32 = arith.constant 0 : i32
    %c0_i32_0 = arith.constant 0 : i32
    %c0_i32_1 = arith.constant 0 : i32
    return %c0_i32, %c0_i32_0 : i32, i32
  }
  func.func @transform_7(%arg0: i32) -> (i32, i32) {
    %c0_i32 = arith.constant 0 : i32
    %c0_i32_0 = arith.constant 0 : i32
    return %arg0, %c0_i32 : i32, i32
  }
}

</mosaic_0001>

<llo_original>
// kernel: tpu_custom_call.1
$region0: #{tpu_custom_call.1}
  #allocation0 [shape = 'u32[]', space=smem, size = 0x4, offset = 0x4, fixed_abs, tag = 'smem constant byte address 0x4 - core index']
  #allocation1 [shape = 'u32[72,128]{1,0:T(1,128)}', space=vmem, size = 0x9000, scoped, tag = 'internal scratch']
  #allocation2 [shape = 'f32[1,1]{1,0:T(1,128)S(1)}', space=vmem, size = 0x200, scoped, tag = 'scoped memory for tpu_custom_call.1']
  %s0 = inlined_call_operand.vmem [shape: f32[2,64], index: 0, kind: input, shape index: {}]
  %s1 = inlined_call_operand.vmem [shape: bf16[64,256], index: 1, kind: input, shape index: {}]
  %s2 = inlined_call_operand.vmem [shape: f32[1,256], index: 2, kind: input, shape index: {}]
  %s3 = inlined_call_operand.hbm [shape: bf16[256,128], index: 3, kind: input, shape index: {}]
  %s4 = inlined_call_operand.vmem [shape: f32[1,128], index: 4, kind: input, shape index: {}]
  %s5 = inlined_call_operand.vmem [shape: bf16[128,1], index: 5, kind: input, shape index: {}]
  %s6 = inlined_call_operand.<no memory space> [shape: f32[1,1], index: 6, kind: input, shape index: {}]
  %s7 = inlined_call_operand.hbm [shape: f32[1,16], index: 7, kind: output, shape index: {}]
  %s8 = sld [smem:[#allocation0]]
  $region42: #{tpu_custom_call.1} parent=0
    _
  %s10 = ssub.s32 1, %s8
  %s11 = scalar_select 0, %s10, %s8
  %v12 = vstv %s6
  %13 = vst [vmem:[#allocation2] sm:$0x1] %v12
  $region1: #{tpu_custom_call.1} parent=0
    #allocation3 [shape = 'u8[65536]{0}', space=vmem, size = 0x10000, scoped, tag = 'input window, operand 3, single buffered']
    #allocation4 [shape = 's32[1]{0}', space=sflag, size = 0x4, scoped, tag = 'scoped memory for tpu_custom_call.1']
    #allocation5 [shape = 's32[1]{0}', space=sflag, size = 0x4, scoped, tag = 'scoped memory for tpu_custom_call.1']
    #allocation6 [shape = 'u8[512]{0}', space=vmem, size = 0x400, scoped, tag = 'output window, operand 0, single buffered']
    %14 = vsyncpa [#allocation4], 0
    %15 = vsyncpa [#allocation5], 0
    // Predicated region
    $region2: #{tpu_custom_call.1} parent=1 // pred_check
      _
    $region3: #{tpu_custom_call.1} parent=1 // pred_check_branch
      %17 = sbr.rel (0) target = $region5
    $region4: #{tpu_custom_call.1} parent=1 // pred_region
      _
    $region5: #{tpu_custom_call.1} parent=1 // pred_fallthru
      _
    // Predicated region
    $region6: #{tpu_custom_call.1} parent=1 // pred_check
      _
    $region7: #{tpu_custom_call.1} parent=1 // pred_check_branch
      %19 = sbr.rel (0) target = $region9
    $region8: #{tpu_custom_call.1} parent=1 // pred_region
      _
    $region9: #{tpu_custom_call.1} parent=1 // pred_fallthru
      _
    // Predicated region
    $region10: #{tpu_custom_call.1} parent=1 // pred_check
      _
    $region11: #{tpu_custom_call.1} parent=1 // pred_check_branch
      %21 = sbr.rel (0) target = $region13
    $region12: #{tpu_custom_call.1} parent=1 // pred_region
      _
    $region13: #{tpu_custom_call.1} parent=1 // pred_fallthru
      _
    // Predicated region
    $region14: #{tpu_custom_call.1} parent=1 // pred_check
      _
    $region15: #{tpu_custom_call.1} parent=1 // pred_check_branch
      %23 = sbr.rel (0) target = $region17
    $region16: #{tpu_custom_call.1} parent=1 // pred_region
      %25 = vsyncadd [#allocation4], 0
      %s26 = sshll.u32 %s3, 4
      %s27 = int_to_ptr.hbm [resolvable:$true] %s26
      %s28 = sshll.u32 [#allocation3], 4
      %s29 = int_to_ptr.vmem [resolvable:$true] %s28
      %34 = dma.hbm_to_vmem [thread:$0]  %s27, 2048, %s29, [#allocation4], 64, 64, 4
    $region17: #{tpu_custom_call.1} parent=1 // pred_fallthru
      _
    // Predicated region
    $region18: #{tpu_custom_call.1} parent=1 // pred_check
      _
    $region19: #{tpu_custom_call.1} parent=1 // pred_check_branch
      %36 = sbr.rel (0) target = $region21
    $region20: #{tpu_custom_call.1} parent=1 // pred_region
      _
    $region21: #{tpu_custom_call.1} parent=1 // pred_fallthru
      _
    // Predicated region
    $region22: #{tpu_custom_call.1} parent=1 // pred_check
      _
    $region23: #{tpu_custom_call.1} parent=1 // pred_check_branch
      %38 = sbr.rel (0) target = $region25
    $region24: #{tpu_custom_call.1} parent=1 // pred_region
      _
    $region25: #{tpu_custom_call.1} parent=1 // pred_fallthru
      _
    // Predicated region
    $region26: #{tpu_custom_call.1} parent=1 // pred_check
      _
    $region27: #{tpu_custom_call.1} parent=1 // pred_check_branch
      %40 = sbr.rel (0) target = $region29
    $region28: #{tpu_custom_call.1} parent=1 // pred_region
      _
    $region29: #{tpu_custom_call.1} parent=1 // pred_fallthru
      _
    // Predicated region
    $region30: #{tpu_custom_call.1} parent=1 // pred_check
      _
    $region31: #{tpu_custom_call.1} parent=1 // pred_check_branch
      %42 = sbr.rel (0) target = $region33
    $region32: #{tpu_custom_call.1} parent=1 // pred_region
      %44 = dma.done [#allocation4], 2048
    $region33: #{tpu_custom_call.1} parent=1 // pred_fallthru
      _
    %v46 = vld [vmem:[%s0] sm:$0xff]
    %v47 = vld [vmem:[%s0 + $0x8] sm:$0xff]
    %v48 = vpack.c.bf16 %v47, %v46
    %v49 = vld [vmem:[%s1] sm:$0xff]
    %v50 = vld [vmem:[%s1 + $0x8] sm:$0xff]
    %v51 = vld [vmem:[%s1 + $0x10] sm:$0xff]
    %v52 = vld [vmem:[%s1 + $0x18] sm:$0xff]
    %v53 = vld [vmem:[%s1 + $0x20] sm:$0xff]
    %v54 = vld [vmem:[%s1 + $0x28] sm:$0xff]
    %v55 = vld [vmem:[%s1 + $0x30] sm:$0xff]
    %v56 = vld [vmem:[%s1 + $0x38] sm:$0xff]
    %v57 = vld [vmem:[%s2] sm:$0x3]
    %v59 = vperm.slane %v57, 0
    %v60 = vperm.slane %v57, 1
    %v71 = vunpack.c.l.b16 %v49
    %v72 = vunpack.c.h.b16 %v49
    %v73 = vunpack.c.l.b16 %v50
    %v74 = vunpack.c.h.b16 %v50
    %v75 = vunpack.c.l.b16 %v51
    %v76 = vunpack.c.h.b16 %v51
    %v77 = vunpack.c.l.b16 %v52
    %v78 = vunpack.c.h.b16 %v52
    %v79 = vunpack.c.l.b16 %v53
    %v80 = vunpack.c.h.b16 %v53
    %v81 = vunpack.c.l.b16 %v54
    %v82 = vunpack.c.h.b16 %v54
    %v83 = vunpack.c.l.b16 %v55
    %v84 = vunpack.c.h.b16 %v55
    %v85 = vunpack.c.l.b16 %v56
    %v86 = vunpack.c.h.b16 %v56
    %v87 = vpack.c.b16 %v73, %v71
    %v88 = vpack.c.b16 %v74, %v72
    %v89 = vpack.c.b16 %v77, %v75
    %v90 = vpack.c.b16 %v78, %v76
    %v91 = vpack.c.b16 %v81, %v79
    %v92 = vpack.c.b16 %v82, %v80
    %v93 = vpack.c.b16 %v85, %v83
    %v94 = vpack.c.b16 %v86, %v84
    %vm103 = vcmask 523264
    %v105 = vsel %vm103, %v48, 0
    %107 = vmatpush.bf16.msra.mxu0 0
    %108 = vmatpush.bf16.msra.mxu0 0
    %109 = vmatpush.bf16.msra.mxu0 0
    %110 = vmatpush.bf16.msra.mxu0 0
    %111 = vmatpush.bf16.msra.mxu0 %v93
    %112 = vmatpush.bf16.msra.mxu0 %v91
    %113 = vmatpush.bf16.msra.mxu0 %v89
    %114 = vmatpush.bf16.msra.mxu0 %v87
    %115 = vmatmul.bf16.gmra.mxu0 %v105
    %v116 = vpop.f32.mrf.mxu0
    %v117 = vadd.f32 %v59, %v116
    %v118 = vpop.f32.mrf.mxu0
    %v119 = vadd.f32 %v59, %v118
    %120 = vdwg.mxu0
    %121 = vmatpush.bf16.msra.mxu0 0
    %122 = vmatpush.bf16.msra.mxu0 0
    %123 = vmatpush.bf16.msra.mxu0 0
    %124 = vmatpush.bf16.msra.mxu0 0
    %125 = vmatpush.bf16.msra.mxu0 %v94
    %126 = vmatpush.bf16.msra.mxu0 %v92
    %127 = vmatpush.bf16.msra.mxu0 %v90
    %128 = vmatpush.bf16.msra.mxu0 %v88
    %129 = vmatmul.bf16.gmra.mxu0 %v105
    %v130 = vpop.f32.mrf.mxu0
    %v131 = vadd.f32 %v60, %v130
    %v132 = vpop.f32.mrf.mxu0
    %v133 = vadd.f32 %v60, %v132
    %134 = vdwg.mxu0
    %v135 = vmul.f32 %v117, 0.2
    %v136 = vmul.f32 %v131, 0.2
    %v137 = vmul.f32 %v119, 0.2
    %v138 = vmul.f32 %v133, 0.2
    %v139 = vmax.f32 %v117, %v135
    %v140 = vmax.f32 %v131, %v136
    %v141 = vmax.f32 %v119, %v137
    %v142 = vmax.f32 %v133, %v138
    %v143 = vpack.c.bf16 %v141, %v139
    %v144 = vpack.c.bf16 %v142, %v140
    %v145 = vld [vmem:[#allocation3] sm:$0xf]
    %v146 = vld [vmem:[#allocation3 + $0x4] sm:$0xf]
    %v147 = vld [vmem:[#allocation3 + $0x8] sm:$0xf]
    %v148 = vld [vmem:[#allocation3 + $0xc] sm:$0xf]
    %v149 = vld [vmem:[#allocation3 + $0x10] sm:$0xf]
    %v150 = vld [vmem:[#allocation3 + $0x14] sm:$0xf]
    %v151 = vld [vmem:[#allocation3 + $0x18] sm:$0xf]
    %v152 = vld [vmem:[#allocation3 + $0x1c] sm:$0xf]
    %v153 = vld [vmem:[#allocation3 + $0x20] sm:$0xf]
    %v154 = vld [vmem:[#allocation3 + $0x24] sm:$0xf]
    %v155 = vld [vmem:[#allocation3 + $0x28] sm:$0xf]
    %v156 = vld [vmem:[#allocation3 + $0x2c] sm:$0xf]
    %v157 = vld [vmem:[#allocation3 + $0x30] sm:$0xf]
    %v158 = vld [vmem:[#allocation3 + $0x34] sm:$0xf]
    %v159 = vld [vmem:[#allocation3 + $0x38] sm:$0xf]
    %v160 = vld [vmem:[#allocation3 + $0x3c] sm:$0xf]
    %v161 = vld [vmem:[#allocation3 + $0x40] sm:$0xf]
    %v162 = vld [vmem:[#allocation3 + $0x44] sm:$0xf]
    %v163 = vld [vmem:[#allocation3 + $0x48] sm:$0xf]
    %v164 = vld [vmem:[#allocation3 + $0x4c] sm:$0xf]
    %v165 = vld [vmem:[#allocation3 + $0x50] sm:$0xf]
    %v166 = vld [vmem:[#allocation3 + $0x54] sm:$0xf]
    %v167 = vld [vmem:[#allocation3 + $0x58] sm:$0xf]
    %v168 = vld [vmem:[#allocation3 + $0x5c] sm:$0xf]
    %v169 = vld [vmem:[#allocation3 + $0x60] sm:$0xf]
    %v170 = vld [vmem:[#allocation3 + $0x64] sm:$0xf]
    %v171 = vld [vmem:[#allocation3 + $0x68] sm:$0xf]
    %v172 = vld [vmem:[#allocation3 + $0x6c] sm:$0xf]
    %v173 = vld [vmem:[#allocation3 + $0x70] sm:$0xf]
    %v174 = vld [vmem:[#allocation3 + $0x74] sm:$0xf]
    %v175 = vld [vmem:[#allocation3 + $0x78] sm:$0xf]
    %v176 = vld [vmem:[#allocation3 + $0x7c] sm:$0xf]
    %v177 = vld [vmem:[%s4] sm:$0x1]
    %v179 = vperm.slane %v177, 0
    %v213 = vunpack.c.l.b16 %v145
    %v214 = vunpack.c.l.b16 %v146
    %v215 = vunpack.c.l.b16 %v147
    %v216 = vunpack.c.l.b16 %v148
    %v217 = vunpack.c.l.b16 %v149
    %v218 = vunpack.c.l.b16 %v150
    %v219 = vunpack.c.l.b16 %v151
    %v220 = vunpack.c.l.b16 %v152
    %v221 = vunpack.c.l.b16 %v153
    %v222 = vunpack.c.l.b16 %v154
    %v223 = vunpack.c.l.b16 %v155
    %v224 = vunpack.c.l.b16 %v156
    %v225 = vunpack.c.l.b16 %v157
    %v226 = vunpack.c.l.b16 %v158
    %v227 = vunpack.c.l.b16 %v159
    %v228 = vunpack.c.l.b16 %v160
    %v229 = vunpack.c.l.b16 %v161
    %v230 = vunpack.c.l.b16 %v162
    %v231 = vunpack.c.l.b16 %v163
    %v232 = vunpack.c.l.b16 %v164
    %v233 = vunpack.c.l.b16 %v165
    %v234 = vunpack.c.l.b16 %v166
    %v235 = vunpack.c.l.b16 %v167
    %v236 = vunpack.c.l.b16 %v168
    %v237 = vunpack.c.l.b16 %v169
    %v238 = vunpack.c.l.b16 %v170
    %v239 = vunpack.c.l.b16 %v171
    %v240 = vunpack.c.l.b16 %v172
    %v241 = vunpack.c.l.b16 %v173
    %v242 = vunpack.c.l.b16 %v174
    %v243 = vunpack.c.l.b16 %v175
    %v244 = vunpack.c.l.b16 %v176
    %v245 = vpack.c.b16 %v214, %v213
    %v246 = vpack.c.b16 %v216, %v215
    %v247 = vpack.c.b16 %v218, %v217
    %v248 = vpack.c.b16 %v220, %v219
    %v249 = vpack.c.b16 %v222, %v221
    %v250 = vpack.c.b16 %v224, %v223
    %v251 = vpack.c.b16 %v226, %v225
    %v252 = vpack.c.b16 %v228, %v227
    %v253 = vpack.c.b16 %v230, %v229
    %v254 = vpack.c.b16 %v232, %v231
    %v255 = vpack.c.b16 %v234, %v233
    %v256 = vpack.c.b16 %v236, %v235
    %v257 = vpack.c.b16 %v238, %v237
    %v258 = vpack.c.b16 %v240, %v239
    %v259 = vpack.c.b16 %v242, %v241
    %v260 = vpack.c.b16 %v244, %v243
    %277 = vmatpush.bf16.msra.mxu0 %v252
    %278 = vmatpush.bf16.msra.mxu0 %v251
    %279 = vmatpush.bf16.msra.mxu0 %v250
    %280 = vmatpush.bf16.msra.mxu0 %v249
    %281 = vmatpush.bf16.msra.mxu0 %v248
    %282 = vmatpush.bf16.msra.mxu0 %v247
    %283 = vmatpush.bf16.msra.mxu0 %v246
    %284 = vmatpush.bf16.msra.mxu0 %v245
    %285 = vmatmul.bf16.gmra.mxu0 %v143
    %v286 = vpop.f32.mrf.mxu0
    %v287 = vadd.f32 %v179, %v286
    %v288 = vpop.f32.mrf.mxu0
    %v289 = vadd.f32 %v179, %v288
    %290 = vdwg.mxu0
    %291 = vmatpush.bf16.msra.mxu0 %v260
    %292 = vmatpush.bf16.msra.mxu0 %v259
    %293 = vmatpush.bf16.msra.mxu0 %v258
    %294 = vmatpush.bf16.msra.mxu0 %v257
    %295 = vmatpush.bf16.msra.mxu0 %v256
    %296 = vmatpush.bf16.msra.mxu0 %v255
    %297 = vmatpush.bf16.msra.mxu0 %v254
    %298 = vmatpush.bf16.msra.mxu0 %v253
    %299 = vmatmul.bf16.gmra.mxu0 %v144
    %v300 = vpop.f32.mrf.mxu0
    %v301 = vadd.f32 %v287, %v300
    %v302 = vpop.f32.mrf.mxu0
    %v303 = vadd.f32 %v289, %v302
    %304 = vdwg.mxu0
    %v305 = vmul.f32 %v301, 0.2
    %v306 = vmul.f32 %v303, 0.2
    %v307 = vmax.f32 %v301, %v305
    %v308 = vmax.f32 %v303, %v306
    %v309 = vpack.c.bf16 %v308, %v307
    %v310 = vld [vmem:[%s5] sm:$0xf]
    %v311 = vld [vmem:[%s5 + $0x4] sm:$0xf]
    %v312 = vld [vmem:[%s5 + $0x8] sm:$0xf]
    %v313 = vld [vmem:[%s5 + $0xc] sm:$0xf]
    %v314 = vld [vmem:[%s5 + $0x10] sm:$0xf]
    %v315 = vld [vmem:[%s5 + $0x14] sm:$0xf]
    %v316 = vld [vmem:[%s5 + $0x18] sm:$0xf]
    %v317 = vld [vmem:[%s5 + $0x1c] sm:$0xf]
    %v318 = vld [vmem:[%s5 + $0x20] sm:$0xf]
    %v319 = vld [vmem:[%s5 + $0x24] sm:$0xf]
    %v320 = vld [vmem:[%s5 + $0x28] sm:$0xf]
    %v321 = vld [vmem:[%s5 + $0x2c] sm:$0xf]
    %v322 = vld [vmem:[%s5 + $0x30] sm:$0xf]
    %v323 = vld [vmem:[%s5 + $0x34] sm:$0xf]
    %v324 = vld [vmem:[%s5 + $0x38] sm:$0xf]
    %v325 = vld [vmem:[%s5 + $0x3c] sm:$0xf]
    %v326 = vld [vmem:[#allocation2] sm:$0x1]
    %v328 = vperm.slane %v326, 0
    %v346 = vunpack.c.l.b16 %v310
    %v347 = vunpack.c.l.b16 %v311
    %v348 = vunpack.c.l.b16 %v312
    %v349 = vunpack.c.l.b16 %v313
    %v350 = vunpack.c.l.b16 %v314
    %v351 = vunpack.c.l.b16 %v315
    %v352 = vunpack.c.l.b16 %v316
    %v353 = vunpack.c.l.b16 %v317
    %v354 = vunpack.c.l.b16 %v318
    %v355 = vunpack.c.l.b16 %v319
    %v356 = vunpack.c.l.b16 %v320
    %v357 = vunpack.c.l.b16 %v321
    %v358 = vunpack.c.l.b16 %v322
    %v359 = vunpack.c.l.b16 %v323
    %v360 = vunpack.c.l.b16 %v324
    %v361 = vunpack.c.l.b16 %v325
    %v362 = vpack.c.b16 %v347, %v346
    %v363 = vpack.c.b16 %v349, %v348
    %v364 = vpack.c.b16 %v351, %v350
    %v365 = vpack.c.b16 %v353, %v352
    %v366 = vpack.c.b16 %v355, %v354
    %v367 = vpack.c.b16 %v357, %v356
    %v368 = vpack.c.b16 %v359, %v358
    %v369 = vpack.c.b16 %v361, %v360
    %378 = vmatpush.bf16.msra.mxu0 %v369
    %379 = vmatpush.bf16.msra.mxu0 %v368
    %380 = vmatpush.bf16.msra.mxu0 %v367
    %381 = vmatpush.bf16.msra.mxu0 %v366
    %382 = vmatpush.bf16.msra.mxu0 %v365
    %383 = vmatpush.bf16.msra.mxu0 %v364
    %384 = vmatpush.bf16.msra.mxu0 %v363
    %385 = vmatpush.bf16.msra.mxu0 %v362
    %386 = vmatmul.bf16.gmra.mxu0 %v309
    %v387 = vpop.f32.mrf.mxu0
    %v388 = vadd.f32 %v328, %v387
    %v389 = vpop.f32.mrf.mxu0
    %v390 = vadd.f32 %v328, %v389
    %391 = vdwg.mxu0
    %v392 = vsub.f32 0.0, %v388
    %v393 = vsub.f32 0.0, %v390
    %v394 = vmul.f32 %v392, 1.442695
    %v395 = vpow.pop %v394
    %v396 = vmul.f32 %v393, 1.442695
    %v397 = vpow.pop %v396
    %v398 = vadd.f32 %v395, 1.0
    %v399 = vadd.f32 %v397, 1.0
    %v400 = vrcp.pop %v398
    %v401 = vrcp.pop %v399
    %402 = vxpose.xlu0.b32.start [1/16] %v400, 128
    %403 = vxpose.xlu0.b32.cont [2/16] %v401, 128
    %404 = vxpose.xlu0.b32.cont [3/16] 0.0, 128
    %405 = vxpose.xlu0.b32.cont [4/16] 0.0, 128
    %406 = vxpose.xlu0.b32.cont [5/16] 0.0, 128
    %407 = vxpose.xlu0.b32.cont [6/16] 0.0, 128
    %408 = vxpose.xlu0.b32.cont [7/16] 0.0, 128
    %409 = vxpose.xlu0.b32.cont [8/16] 0.0, 128
    %410 = vxpose.xlu0.b32.cont [9/16] 0.0, 128
    %411 = vxpose.xlu0.b32.cont [10/16] 0.0, 128
    %412 = vxpose.xlu0.b32.cont [11/16] 0.0, 128
    %413 = vxpose.xlu0.b32.cont [12/16] 0.0, 128
    %414 = vxpose.xlu0.b32.cont [13/16] 0.0, 128
    %415 = vxpose.xlu0.b32.cont [14/16] 0.0, 128
    %416 = vxpose.xlu0.b32.cont [15/16] 0.0, 128
    %417 = vxpose.xlu0.b32.end [16/16] 0.0, 128
    %v418 = vpop.trf.xlu0
    %v419 = vpop.trf.xlu0
    %v420 = vpop.trf.xlu0
    %v421 = vpop.trf.xlu0
    %v422 = vpop.trf.xlu0
    %v423 = vpop.trf.xlu0
    %v424 = vpop.trf.xlu0
    %v425 = vpop.trf.xlu0
    %v426 = vpop.trf.xlu0
    %v427 = vpop.trf.xlu0
    %v428 = vpop.trf.xlu0
    %v429 = vpop.trf.xlu0
    %v430 = vpop.trf.xlu0
    %v431 = vpop.trf.xlu0
    %v432 = vpop.trf.xlu0
    %v433 = vpop.trf.xlu0
    %vm434 = vcmask 122880
    %435 = vst.msk [vmem:[#allocation6] sm:$0x1] %vm434, %v418
    // Predicated region
    $region34: #{tpu_custom_call.1} parent=1 // pred_check
      _
    $region35: #{tpu_custom_call.1} parent=1 // pred_check_branch
      %437 = sbr.rel (0) target = $region37
    $region36: #{tpu_custom_call.1} parent=1 // pred_region
      %439 = vsyncadd [#allocation5], 0
      %s441 = sshll.u32 [#allocation6], 4
      %s442 = int_to_ptr.vmem [resolvable:$true] %s441
      %s443 = sshll.u32 %s7, 4
      %s444 = int_to_ptr.hbm [resolvable:$true] %s443
      %446 = dma.vmem_to_hbm [thread:$0]  %s442, 16, %s444, [#allocation5]
    $region37: #{tpu_custom_call.1} parent=1 // pred_fallthru
      _
    // Predicated region
    $region38: #{tpu_custom_call.1} parent=1 // pred_check
      _
    $region39: #{tpu_custom_call.1} parent=1 // pred_check_branch
      %448 = sbr.rel (0) target = $region41
    $region40: #{tpu_custom_call.1} parent=1 // pred_region
      %450 = dma.done [#allocation5], 16
    $region41: #{tpu_custom_call.1} parent=1 // pred_fallthru
      _
    %451 = vsyncpa [#allocation4], 1
    %452 = vsyncpa [#allocation5], 1

// kernel: tpu_custom_call.1
$region0: #{tpu_custom_call.1}
  #allocation0 [shape = 'u32[]', space=smem, size = 0x4, offset = 0x4, fixed_abs, tag = 'smem constant byte address 0x4 - core index']
  #allocation1 [shape = 'u32[72,128]{1,0:T(1,128)}', space=vmem, size = 0x9000, scoped, tag = 'internal scratch']
  #allocation2 [shape = 'f32[1,1]{1,0:T(1,128)S(1)}', space=vmem, size = 0x200, scoped, tag = 'scoped memory for tpu_custom_call.1']
  %s0 = inlined_call_operand.vmem [shape: f32[2,64], index: 0, kind: input, shape index: {}]
  %s1 = inlined_call_operand.vmem [shape: bf16[64,256], index: 1, kind: input, shape index: {}]
  %s2 = inlined_call_operand.vmem [shape: f32[1,256], index: 2, kind: input, shape index: {}]
  %s3 = inlined_call_operand.hbm [shape: bf16[256,128], index: 3, kind: input, shape index: {}]
  %s4 = inlined_call_operand.vmem [shape: f32[1,128], index: 4, kind: input, shape index: {}]
  %s5 = inlined_call_operand.vmem [shape: bf16[128,1], index: 5, kind: input, shape index: {}]
  %s6 = inlined_call_operand.<no memory space> [shape: f32[1,1], index: 6, kind: input, shape index: {}]
  %s7 = inlined_call_operand.hbm [shape: f32[1,16], index: 7, kind: output, shape index: {}]
  %s8 = sld [smem:[#allocation0]]
  $region42: #{tpu_custom_call.1} parent=0
    _
  %s10 = ssub.s32 1, %s8
  %s11 = scalar_select 0, %s10, %s8
  %v12 = vstv %s6
  %13 = vst [vmem:[#allocation2] sm:$0x1] %v12
  $region1: #{tpu_custom_call.1} parent=0
    #allocation3 [shape = 'u8[65536]{0}', space=vmem, size = 0x10000, scoped, tag = 'input window, operand 3, single buffered']
    #allocation4 [shape = 's32[1]{0}', space=sflag, size = 0x4, scoped, tag = 'scoped memory for tpu_custom_call.1']
    #allocation5 [shape = 's32[1]{0}', space=sflag, size = 0x4, scoped, tag = 'scoped memory for tpu_custom_call.1']
    #allocation6 [shape = 'u8[512]{0}', space=vmem, size = 0x400, scoped, tag = 'output window, operand 0, single buffered']
    %14 = vsyncpa [#allocation4], 0
    %15 = vsyncpa [#allocation5], 0
    // Predicated region
    $region2: #{tpu_custom_call.1} parent=1 // pred_check
      _
    $region3: #{tpu_custom_call.1} parent=1 // pred_check_branch
      %17 = sbr.rel (0) target = $region5
    $region4: #{tpu_custom_call.1} parent=1 // pred_region
      _
    $region5: #{tpu_custom_call.1} parent=1 // pred_fallthru
      _
    // Predicated region
    $region6: #{tpu_custom_call.1} parent=1 // pred_check
      _
    $region7: #{tpu_custom_call.1} parent=1 // pred_check_branch
      %19 = sbr.rel (0) target = $region9
    $region8: #{tpu_custom_call.1} parent=1 // pred_region
      _
    $region9: #{tpu_custom_call.1} parent=1 // pred_fallthru
      _
    // Predicated region
    $region10: #{tpu_custom_call.1} parent=1 // pred_check
      _
    $region11: #{tpu_custom_call.1} parent=1 // pred_check_branch
      %21 = sbr.rel (0) target = $region13
    $region12: #{tpu_custom_call.1} parent=1 // pred_region
      _
    $region13: #{tpu_custom_call.1} parent=1 // pred_fallthru
      _
    // Predicated region
    $region14: #{tpu_custom_call.1} parent=1 // pred_check
      _
    $region15: #{tpu_custom_call.1} parent=1 // pred_check_branch
      %23 = sbr.rel (0) target = $region17
    $region16: #{tpu_custom_call.1} parent=1 // pred_region
      %25 = vsyncadd [#allocation4], 0
      %s26 = sshll.u32 %s3, 4
      %s27 = int_to_ptr.hbm [resolvable:$true] %s26
      %s28 = sshll.u32 [#allocation3], 4
      %s29 = int_to_ptr.vmem [resolvable:$true] %s28
      %34 = dma.hbm_to_vmem [thread:$0]  %s27, 2048, %s29, [#allocation4], 64, 64, 4
    $region17: #{tpu_custom_call.1} parent=1 // pred_fallthru
      _
    // Predicated region
    $region18: #{tpu_custom_call.1} parent=1 // pred_check
      _
    $region19: #{tpu_custom_call.1} parent=1 // pred_check_branch
      %36 = sbr.rel (0) target = $region21
    $region20: #{tpu_custom_call.1} parent=1 // pred_region
      _
    $region21: #{tpu_custom_call.1} parent=1 // pred_fallthru
      _
    // Predicated region
    $region22: #{tpu_custom_call.1} parent=1 // pred_check
      _
    $region23: #{tpu_custom_call.1} parent=1 // pred_check_branch
      %38 = sbr.rel (0) target = $region25
    $region24: #{tpu_custom_call.1} parent=1 // pred_region
      _
    $region25: #{tpu_custom_call.1} parent=1 // pred_fallthru
      _
    // Predicated region
    $region26: #{tpu_custom_call.1} parent=1 // pred_check
      _
    $region27: #{tpu_custom_call.1} parent=1 // pred_check_branch
      %40 = sbr.rel (0) target = $region29
    $region28: #{tpu_custom_call.1} parent=1 // pred_region
      _
    $region29: #{tpu_custom_call.1} parent=1 // pred_fallthru
      _
    // Predicated region
    $region30: #{tpu_custom_call.1} parent=1 // pred_check
      _
    $region31: #{tpu_custom_call.1} parent=1 // pred_check_branch
      %42 = sbr.rel (0) target = $region33
    $region32: #{tpu_custom_call.1} parent=1 // pred_region
      %44 = dma.done [#allocation4], 2048
    $region33: #{tpu_custom_call.1} parent=1 // pred_fallthru
      _
    %v46 = vld [vmem:[%s0] sm:$0xff]
    %v47 = vld [vmem:[%s0 + $0x8] sm:$0xff]
    %v48 = vpack.c.bf16 %v47, %v46
    %v49 = vld [vmem:[%s1] sm:$0xff]
    %v50 = vld [vmem:[%s1 + $0x8] sm:$0xff]
    %v51 = vld [vmem:[%s1 + $0x10] sm:$0xff]
    %v52 = vld [vmem:[%s1 + $0x18] sm:$0xff]
    %v53 = vld [vmem:[%s1 + $0x20] sm:$0xff]
    %v54 = vld [vmem:[%s1 + $0x28] sm:$0xff]
    %v55 = vld [vmem:[%s1 + $0x30] sm:$0xff]
    %v56 = vld [vmem:[%s1 + $0x38] sm:$0xff]
    %v57 = vld [vmem:[%s2] sm:$0x3]
    %v59 = vperm.slane %v57, 0
    %v60 = vperm.slane %v57, 1
    %v71 = vunpack.c.l.b16 %v49
    %v72 = vunpack.c.h.b16 %v49
    %v73 = vunpack.c.l.b16 %v50
    %v74 = vunpack.c.h.b16 %v50
    %v75 = vunpack.c.l.b16 %v51
    %v76 = vunpack.c.h.b16 %v51
    %v77 = vunpack.c.l.b16 %v52
    %v78 = vunpack.c.h.b16 %v52
    %v79 = vunpack.c.l.b16 %v53
    %v80 = vunpack.c.h.b16 %v53
    %v81 = vunpack.c.l.b16 %v54
    %v82 = vunpack.c.h.b16 %v54
    %v83 = vunpack.c.l.b16 %v55
    %v84 = vunpack.c.h.b16 %v55
    %v85 = vunpack.c.l.b16 %v56
    %v86 = vunpack.c.h.b16 %v56
    %v87 = vpack.c.b16 %v73, %v71
    %v88 = vpack.c.b16 %v74, %v72
    %v89 = vpack.c.b16 %v77, %v75
    %v90 = vpack.c.b16 %v78, %v76
    %v91 = vpack.c.b16 %v81, %v79
    %v92 = vpack.c.b16 %v82, %v80
    %v93 = vpack.c.b16 %v85, %v83
    %v94 = vpack.c.b16 %v86, %v84
    %vm103 = vcmask 523264
    %v105 = vsel %vm103, %v48, 0
    %107 = vmatpush.bf16.msra.mxu0 0
    %108 = vmatpush.bf16.msra.mxu0 0
    %109 = vmatpush.bf16.msra.mxu0 0
    %110 = vmatpush.bf16.msra.mxu0 0
    %111 = vmatpush.bf16.msra.mxu0 %v93
    %112 = vmatpush.bf16.msra.mxu0 %v91
    %113 = vmatpush.bf16.msra.mxu0 %v89
    %114 = vmatpush.bf16.msra.mxu0 %v87
    %115 = vmatmul.bf16.gmra.mxu0 %v105
    %v116 = vpop.f32.mrf.mxu0
    %v117 = vadd.f32 %v59, %v116
    %v118 = vpop.f32.mrf.mxu0
    %v119 = vadd.f32 %v59, %v118
    %120 = vdwg.mxu0
    %121 = vmatpush.bf16.msra.mxu0 0
    %122 = vmatpush.bf16.msra.mxu0 0
    %123 = vmatpush.bf16.msra.mxu0 0
    %124 = vmatpush.bf16.msra.mxu0 0
    %125 = vmatpush.bf16.msra.mxu0 %v94
    %126 = vmatpush.bf16.msra.mxu0 %v92
    %127 = vmatpush.bf16.msra.mxu0 %v90
    %128 = vmatpush.bf16.msra.mxu0 %v88
    %129 = vmatmul.bf16.gmra.mxu0 %v105
    %v130 = vpop.f32.mrf.mxu0
    %v131 = vadd.f32 %v60, %v130
    %v132 = vpop.f32.mrf.mxu0
    %v133 = vadd.f32 %v60, %v132
    %134 = vdwg.mxu0
    %v135 = vmul.f32 %v117, 0.2
    %v136 = vmul.f32 %v131, 0.2
    %v137 = vmul.f32 %v119, 0.2
    %v138 = vmul.f32 %v133, 0.2
    %v139 = vmax.f32 %v117, %v135
    %v140 = vmax.f32 %v131, %v136
    %v141 = vmax.f32 %v119, %v137
    %v142 = vmax.f32 %v133, %v138
    %v143 = vpack.c.bf16 %v141, %v139
    %v144 = vpack.c.bf16 %v142, %v140
    %v145 = vld [vmem:[#allocation3] sm:$0xf]
    %v146 = vld [vmem:[#allocation3 + $0x4] sm:$0xf]
    %v147 = vld [vmem:[#allocation3 + $0x8] sm:$0xf]
    %v148 = vld [vmem:[#allocation3 + $0xc] sm:$0xf]
    %v149 = vld [vmem:[#allocation3 + $0x10] sm:$0xf]
    %v150 = vld [vmem:[#allocation3 + $0x14] sm:$0xf]
    %v151 = vld [vmem:[#allocation3 + $0x18] sm:$0xf]
    %v152 = vld [vmem:[#allocation3 + $0x1c] sm:$0xf]
    %v153 = vld [vmem:[#allocation3 + $0x20] sm:$0xf]
    %v154 = vld [vmem:[#allocation3 + $0x24] sm:$0xf]
    %v155 = vld [vmem:[#allocation3 + $0x28] sm:$0xf]
    %v156 = vld [vmem:[#allocation3 + $0x2c] sm:$0xf]
    %v157 = vld [vmem:[#allocation3 + $0x30] sm:$0xf]
    %v158 = vld [vmem:[#allocation3 + $0x34] sm:$0xf]
    %v159 = vld [vmem:[#allocation3 + $0x38] sm:$0xf]
    %v160 = vld [vmem:[#allocation3 + $0x3c] sm:$0xf]
    %v161 = vld [vmem:[#allocation3 + $0x40] sm:$0xf]
    %v162 = vld [vmem:[#allocation3 + $0x44] sm:$0xf]
    %v163 = vld [vmem:[#allocation3 + $0x48] sm:$0xf]
    %v164 = vld [vmem:[#allocation3 + $0x4c] sm:$0xf]
    %v165 = vld [vmem:[#allocation3 + $0x50] sm:$0xf]
    %v166 = vld [vmem:[#allocation3 + $0x54] sm:$0xf]
    %v167 = vld [vmem:[#allocation3 + $0x58] sm:$0xf]
    %v168 = vld [vmem:[#allocation3 + $0x5c] sm:$0xf]
    %v169 = vld [vmem:[#allocation3 + $0x60] sm:$0xf]
    %v170 = vld [vmem:[#allocation3 + $0x64] sm:$0xf]
    %v171 = vld [vmem:[#allocation3 + $0x68] sm:$0xf]
    %v172 = vld [vmem:[#allocation3 + $0x6c] sm:$0xf]
    %v173 = vld [vmem:[#allocation3 + $0x70] sm:$0xf]
    %v174 = vld [vmem:[#allocation3 + $0x74] sm:$0xf]
    %v175 = vld [vmem:[#allocation3 + $0x78] sm:$0xf]
    %v176 = vld [vmem:[#allocation3 + $0x7c] sm:$0xf]
    %v177 = vld [vmem:[%s4] sm:$0x1]
    %v179 = vperm.slane %v177, 0
    %v213 = vunpack.c.l.b16 %v145
    %v214 = vunpack.c.l.b16 %v146
    %v215 = vunpack.c.l.b16 %v147
    %v216 = vunpack.c.l.b16 %v148
    %v217 = vunpack.c.l.b16 %v149
    %v218 = vunpack.c.l.b16 %v150
    %v219 = vunpack.c.l.b16 %v151
    %v220 = vunpack.c.l.b16 %v152
    %v221 = vunpack.c.l.b16 %v153
    %v222 = vunpack.c.l.b16 %v154
    %v223 = vunpack.c.l.b16 %v155
    %v224 = vunpack.c.l.b16 %v156
    %v225 = vunpack.c.l.b16 %v157
    %v226 = vunpack.c.l.b16 %v158
    %v227 = vunpack.c.l.b16 %v159
    %v228 = vunpack.c.l.b16 %v160
    %v229 = vunpack.c.l.b16 %v161
    %v230 = vunpack.c.l.b16 %v162
    %v231 = vunpack.c.l.b16 %v163
    %v232 = vunpack.c.l.b16 %v164
    %v233 = vunpack.c.l.b16 %v165
    %v234 = vunpack.c.l.b16 %v166
    %v235 = vunpack.c.l.b16 %v167
    %v236 = vunpack.c.l.b16 %v168
    %v237 = vunpack.c.l.b16 %v169
    %v238 = vunpack.c.l.b16 %v170
    %v239 = vunpack.c.l.b16 %v171
    %v240 = vunpack.c.l.b16 %v172
    %v241 = vunpack.c.l.b16 %v173
    %v242 = vunpack.c.l.b16 %v174
    %v243 = vunpack.c.l.b16 %v175
    %v244 = vunpack.c.l.b16 %v176
    %v245 = vpack.c.b16 %v214, %v213
    %v246 = vpack.c.b16 %v216, %v215
    %v247 = vpack.c.b16 %v218, %v217
    %v248 = vpack.c.b16 %v220, %v219
    %v249 = vpack.c.b16 %v222, %v221
    %v250 = vpack.c.b16 %v224, %v223
    %v251 = vpack.c.b16 %v226, %v225
    %v252 = vpack.c.b16 %v228, %v227
    %v253 = vpack.c.b16 %v230, %v229
    %v254 = vpack.c.b16 %v232, %v231
    %v255 = vpack.c.b16 %v234, %v233
    %v256 = vpack.c.b16 %v236, %v235
    %v257 = vpack.c.b16 %v238, %v237
    %v258 = vpack.c.b16 %v240, %v239
    %v259 = vpack.c.b16 %v242, %v241
    %v260 = vpack.c.b16 %v244, %v243
    %277 = vmatpush.bf16.msra.mxu0 %v252
    %278 = vmatpush.bf16.msra.mxu0 %v251
    %279 = vmatpush.bf16.msra.mxu0 %v250
    %280 = vmatpush.bf16.msra.mxu0 %v249
    %281 = vmatpush.bf16.msra.mxu0 %v248
    %282 = vmatpush.bf16.msra.mxu0 %v247
    %283 = vmatpush.bf16.msra.mxu0 %v246
    %284 = vmatpush.bf16.msra.mxu0 %v245
    %285 = vmatmul.bf16.gmra.mxu0 %v143
    %v286 = vpop.f32.mrf.mxu0
    %v287 = vadd.f32 %v179, %v286
    %v288 = vpop.f32.mrf.mxu0
    %v289 = vadd.f32 %v179, %v288
    %290 = vdwg.mxu0
    %291 = vmatpush.bf16.msra.mxu0 %v260
    %292 = vmatpush.bf16.msra.mxu0 %v259
    %293 = vmatpush.bf16.msra.mxu0 %v258
    %294 = vmatpush.bf16.msra.mxu0 %v257
    %295 = vmatpush.bf16.msra.mxu0 %v256
    %296 = vmatpush.bf16.msra.mxu0 %v255
    %297 = vmatpush.bf16.msra.mxu0 %v254
    %298 = vmatpush.bf16.msra.mxu0 %v253
    %299 = vmatmul.bf16.gmra.mxu0 %v144
    %v300 = vpop.f32.mrf.mxu0
    %v301 = vadd.f32 %v287, %v300
    %v302 = vpop.f32.mrf.mxu0
    %v303 = vadd.f32 %v289, %v302
    %304 = vdwg.mxu0
    %v305 = vmul.f32 %v301, 0.2
    %v306 = vmul.f32 %v303, 0.2
    %v307 = vmax.f32 %v301, %v305
    %v308 = vmax.f32 %v303, %v306
    %v309 = vpack.c.bf16 %v308, %v307
    %v310 = vld [vmem:[%s5] sm:$0xf]
    %v311 = vld [vmem:[%s5 + $0x4] sm:$0xf]
    %v312 = vld [vmem:[%s5 + $0x8] sm:$0xf]
    %v313 = vld [vmem:[%s5 + $0xc] sm:$0xf]
    %v314 = vld [vmem:[%s5 + $0x10] sm:$0xf]
    %v315 = vld [vmem:[%s5 + $0x14] sm:$0xf]
    %v316 = vld [vmem:[%s5 + $0x18] sm:$0xf]
    %v317 = vld [vmem:[%s5 + $0x1c] sm:$0xf]
    %v318 = vld [vmem:[%s5 + $0x20] sm:$0xf]
    %v319 = vld [vmem:[%s5 + $0x24] sm:$0xf]
    %v320 = vld [vmem:[%s5 + $0x28] sm:$0xf]
    %v321 = vld [vmem:[%s5 + $0x2c] sm:$0xf]
    %v322 = vld [vmem:[%s5 + $0x30] sm:$0xf]
    %v323 = vld [vmem:[%s5 + $0x34] sm:$0xf]
    %v324 = vld [vmem:[%s5 + $0x38] sm:$0xf]
    %v325 = vld [vmem:[%s5 + $0x3c] sm:$0xf]
    %v326 = vld [vmem:[#allocation2] sm:$0x1]
    %v328 = vperm.slane %v326, 0
    %v346 = vunpack.c.l.b16 %v310
    %v347 = vunpack.c.l.b16 %v311
    %v348 = vunpack.c.l.b16 %v312
    %v349 = vunpack.c.l.b16 %v313
    %v350 = vunpack.c.l.b16 %v314
    %v351 = vunpack.c.l.b16 %v315
    %v352 = vunpack.c.l.b16 %v316
    %v353 = vunpack.c.l.b16 %v317
    %v354 = vunpack.c.l.b16 %v318
    %v355 = vunpack.c.l.b16 %v319
    %v356 = vunpack.c.l.b16 %v320
    %v357 = vunpack.c.l.b16 %v321
    %v358 = vunpack.c.l.b16 %v322
    %v359 = vunpack.c.l.b16 %v323
    %v360 = vunpack.c.l.b16 %v324
    %v361 = vunpack.c.l.b16 %v325
    %v362 = vpack.c.b16 %v347, %v346
    %v363 = vpack.c.b16 %v349, %v348
    %v364 = vpack.c.b16 %v351, %v350
    %v365 = vpack.c.b16 %v353, %v352
    %v366 = vpack.c.b16 %v355, %v354
    %v367 = vpack.c.b16 %v357, %v356
    %v368 = vpack.c.b16 %v359, %v358
    %v369 = vpack.c.b16 %v361, %v360
    %378 = vmatpush.bf16.msra.mxu0 %v369
    %379 = vmatpush.bf16.msra.mxu0 %v368
    %380 = vmatpush.bf16.msra.mxu0 %v367
    %381 = vmatpush.bf16.msra.mxu0 %v366
    %382 = vmatpush.bf16.msra.mxu0 %v365
    %383 = vmatpush.bf16.msra.mxu0 %v364
    %384 = vmatpush.bf16.msra.mxu0 %v363
    %385 = vmatpush.bf16.msra.mxu0 %v362
    %386 = vmatmul.bf16.gmra.mxu0 %v309
    %v387 = vpop.f32.mrf.mxu0
    %v388 = vadd.f32 %v328, %v387
    %v389 = vpop.f32.mrf.mxu0
    %v390 = vadd.f32 %v328, %v389
    %391 = vdwg.mxu0
    %v392 = vsub.f32 0.0, %v388
    %v393 = vsub.f32 0.0, %v390
    %v394 = vmul.f32 %v392, 1.442695
    %v395 = vpow.pop %v394
    %v396 = vmul.f32 %v393, 1.442695
    %v397 = vpow.pop %v396
    %v398 = vadd.f32 %v395, 1.0
    %v399 = vadd.f32 %v397, 1.0
    %v400 = vrcp.pop %v398
    %v401 = vrcp.pop %v399
    %402 = vxpose.xlu0.b32.start [1/16] %v400, 128
    %403 = vxpose.xlu0.b32.cont [2/16] %v401, 128
    %404 = vxpose.xlu0.b32.cont [3/16] 0.0, 128
    %405 = vxpose.xlu0.b32.cont [4/16] 0.0, 128
    %406 = vxpose.xlu0.b32.cont [5/16] 0.0, 128
    %407 = vxpose.xlu0.b32.cont [6/16] 0.0, 128
    %408 = vxpose.xlu0.b32.cont [7/16] 0.0, 128
    %409 = vxpose.xlu0.b32.cont [8/16] 0.0, 128
    %410 = vxpose.xlu0.b32.cont [9/16] 0.0, 128
    %411 = vxpose.xlu0.b32.cont [10/16] 0.0, 128
    %412 = vxpose.xlu0.b32.cont [11/16] 0.0, 128
    %413 = vxpose.xlu0.b32.cont [12/16] 0.0, 128
    %414 = vxpose.xlu0.b32.cont [13/16] 0.0, 128
    %415 = vxpose.xlu0.b32.cont [14/16] 0.0, 128
    %416 = vxpose.xlu0.b32.cont [15/16] 0.0, 128
    %417 = vxpose.xlu0.b32.end [16/16] 0.0, 128
    %v418 = vpop.trf.xlu0
    %v419 = vpop.trf.xlu0
    %v420 = vpop.trf.xlu0
    %v421 = vpop.trf.xlu0
    %v422 = vpop.trf.xlu0
    %v423 = vpop.trf.xlu0
    %v424 = vpop.trf.xlu0
    %v425 = vpop.trf.xlu0
    %v426 = vpop.trf.xlu0
    %v427 = vpop.trf.xlu0
    %v428 = vpop.trf.xlu0
    %v429 = vpop.trf.xlu0
    %v430 = vpop.trf.xlu0
    %v431 = vpop.trf.xlu0
    %v432 = vpop.trf.xlu0
    %v433 = vpop.trf.xlu0
    %vm434 = vcmask 122880
    %435 = vst.msk [vmem:[#allocation6] sm:$0x1] %vm434, %v418
    // Predicated region
    $region34: #{tpu_custom_call.1} parent=1 // pred_check
      _
    $region35: #{tpu_custom_call.1} parent=1 // pred_check_branch
      %437 = sbr.rel (0) target = $region37
    $region36: #{tpu_custom_call.1} parent=1 // pred_region
      %439 = vsyncadd [#allocation5], 0
      %s441 = sshll.u32 [#allocation6], 4
      %s442 = int_to_ptr.vmem [resolvable:$true] %s441
      %s443 = sshll.u32 %s7, 4
      %s444 = int_to_ptr.hbm [resolvable:$true] %s443
      %446 = dma.vmem_to_hbm [thread:$0]  %s442, 16, %s444, [#allocation5]
    $region37: #{tpu_custom_call.1} parent=1 // pred_fallthru
      _
    // Predicated region
    $region38: #{tpu_custom_call.1} parent=1 // pred_check
      _
    $region39: #{tpu_custom_call.1} parent=1 // pred_check_branch
      %448 = sbr.rel (0) target = $region41
    $region40: #{tpu_custom_call.1} parent=1 // pred_region
      %450 = dma.done [#allocation5], 16
    $region41: #{tpu_custom_call.1} parent=1 // pred_fallthru
      _
    %451 = vsyncpa [#allocation4], 1
    %452 = vsyncpa [#allocation5], 1

</llo_original>
